<compile_context>
chip_gen: v7x
topology: tpu7x:2x2x1
jax: 0.10.0
libtpu: 0.0.40
codegen_flags: <defaults>
</compile_context>

<pallas_src>
import functools

import jax
import jax.numpy as jnp
from jax import lax
from jax.experimental import pallas as pl
from jax.experimental.pallas import tpu as pltpu


def _dropout_kernel(seed_ref, x_ref, o_ref, *, threshold, scale, block_elems,
                    lane_w):
    shape = x_ref.shape
    # Global flat index of every element of this block.
    row = lax.broadcasted_iota(jnp.int32, shape, 0)
    col = lax.broadcasted_iota(jnp.int32, shape, 1)
    base = pl.program_id(0) * block_elems
    idx = (base + row * lane_w + col).astype(jnp.uint32)

    # Counter-based hash (splitmix32-style finalizer), mixed with the seed.
    seed = seed_ref[0].astype(jnp.uint32)
    h = idx * jnp.uint32(0x9E3779B1) + (seed * jnp.uint32(0x85EBCA77)
                                        + jnp.uint32(1))
    h = (h ^ (h >> 16)) * jnp.uint32(0x7FEB352D)
    h = (h ^ (h >> 15)) * jnp.uint32(0x846CA68B)
    h = h ^ (h >> 16)

    keep = h < jnp.uint32(threshold)            # Bernoulli(survival_rate)
    xf = x_ref[...].astype(jnp.float32)
    o_ref[...] = jnp.where(keep, xf * jnp.float32(scale),
                           jnp.float32(0.0)).astype(o_ref.dtype)


_LANE_CANDIDATES = (2048, 1024, 512, 256, 128)


def stochastic_dropout_pallas(x, p, *, training=True, seed=0):
    """Inverted dropout: x * Bernoulli(1-p) / (1-p)."""
    if p < 0.0 or p > 1.0:
        raise ValueError(
            f"drop probability has to be between 0 and 1, but got {p}")
    if not training or p == 0.0:
        return x

    survival_rate = 1.0 - p
    scale = (1.0 / survival_rate) if survival_rate > 0.0 else 0.0
    # uint32 threshold so P(bits < threshold) == survival_rate
    threshold = min(int(round(survival_rate * 2.0 ** 32)), 2 ** 32 - 1)

    orig_shape = x.shape
    flat = x.reshape(-1)                 # pure bitcast for contiguous input
    total = flat.size

    # Lane-dense 2-D view: last dim is a large multiple of 128 when possible.
    lane_w = next((w for w in _LANE_CANDIDATES if total % w == 0), None)
    if lane_w is None:
        lane_w = 128
        pad = (-total) % lane_w
        flat = jnp.pad(flat, (0, pad))
    rows = flat.size // lane_w
    x2d = flat.reshape(rows, lane_w)

    # ~4 MiB blocks: fits comfortably on v7x (64 MiB VMEM) even with
    # double-buffered input + output, and keeps per-grid-step overhead small.
    itemsize = jnp.dtype(x.dtype).itemsize
    target_rows = max(8, (4 * 1024 * 1024 // itemsize) // lane_w)
    if rows <= target_rows:
        br = rows                        # full-rows block (no (8,128) issue)
    else:
        br = (target_rows // 8) * 8      # multiple of 8 sublanes
    grid = (pl.cdiv(rows, br),)          # ragged last block handled by Pallas

    seed_arr = jnp.asarray([seed], dtype=jnp.int32)
    kernel = functools.partial(
        _dropout_kernel,
        threshold=threshold,
        scale=scale,
        block_elems=br * lane_w,
        lane_w=lane_w,
    )

    out2d = pl.pallas_call(
        kernel,
        out_shape=jax.ShapeDtypeStruct((rows, lane_w), x.dtype),
        grid_spec=pltpu.PrefetchScalarGridSpec(
            num_scalar_prefetch=1,
            grid=grid,
            in_specs=[pl.BlockSpec((br, lane_w), lambda i, seed_ref: (i, 0))],
            out_specs=pl.BlockSpec((br, lane_w), lambda i, seed_ref: (i, 0)),
        ),
        compiler_params=pltpu.CompilerParams(
            dimension_semantics=("parallel",),
            vmem_limit_bytes=64 * 1024 * 1024,
        ),
    )(seed_arr, x2d)

    out_flat = out2d.reshape(-1)
    if out_flat.size != total:
        out_flat = out_flat[:total]
    return out_flat.reshape(orig_shape)


class StochasticDropout:
    """JAX/Pallas counterpart of the PyTorch StochasticDropout module."""

    def __init__(self, p: float):
        self.p = p
        self.training = True

    def __call__(self, x, *, seed=0):
        return stochastic_dropout_pallas(
            x, self.p, training=self.training, seed=seed
        )

    def __repr__(self):
        return f"{self.__class__.__name__}(p={self.p})"


if __name__ == "__main__":
    key = jax.random.PRNGKey(0)
    # NCHW input: batch=2, channels=4, spatial=16x16
    x = jax.random.normal(key, (2, 4, 16, 16), dtype=jnp.float32)

    p = 0.3
    module = StochasticDropout(p)

    out = jax.block_until_ready(module(x, seed=1234))

    # shape/dtype preserved
    assert out.shape == x.shape and out.dtype == x.dtype

    # surviving entries are scaled by exactly 1/(1-p)
    keep_mask = out != 0
    ratio = jnp.where(keep_mask, out / jnp.where(x == 0, 1.0, x),
                      1.0 / (1.0 - p))
    assert jnp.allclose(ratio, 1.0 / (1.0 - p), atol=1e-5)

    # survival fraction lands in a (very loose) window around 1-p
    frac = float(jnp.mean(keep_mask.astype(jnp.float32)))
    assert 0.55 < frac < 0.85, f"unexpected survival fraction {frac}"

    # eval mode is the identity
    module.training = False
    out_eval = jax.block_until_ready(module(x))
    assert jnp.array_equal(out_eval, x)

    print("KERNEL_OK")
</pallas_src>

<mosaic_0001>
module attributes {stable_mosaic.version = 11 : i64} {
  func.func @_dropout_kernel(%arg0: i32, %arg1: memref<1xi32, #tpu.memory_space<smem>>, %arg2: memref<1x2048xf32, #tpu.memory_space<vmem>>, %arg3: memref<1x2048xf32, #tpu.memory_space<vmem>>) attributes {dimension_semantics = [#tpu.dimension_semantics<parallel>], iteration_bounds = array<i64: 1>, scalar_prefetch = 1 : i64, scratch_operands = 0 : i64, tpu.core_type = #tpu.core_type<tc>, window_params = [{transform_indices = @transform_0, window_bounds = array<i64: 1, 2048>}, {transform_indices = @transform_1, window_bounds = array<i64: 1, 2048>}]} {
    %0 = tpu.iota {dimensions = array<i32: 0>} : vector<1x2048xi32>
    %1 = tpu.iota {dimensions = array<i32: 1>} : vector<1x2048xi32>
    %c2048_i32 = arith.constant 2048 : i32
    %2 = arith.muli %arg0, %c2048_i32 : i32
    %c2048_i32_0 = arith.constant 2048 : i32
    %3 = vector.broadcast %c2048_i32_0 : i32 to vector<1x2048xi32>
    %4 = arith.muli %0, %3 : vector<1x2048xi32>
    %5 = vector.broadcast %2 : i32 to vector<1x2048xi32>
    %6 = arith.addi %5, %4 : vector<1x2048xi32>
    %7 = arith.addi %6, %1 : vector<1x2048xi32>
    %c0 = arith.constant 0 : index
    %8 = memref.load %arg1[%c0] : memref<1xi32, #tpu.memory_space<smem>>
    %c-1640531535_i32 = arith.constant -1640531535 : i32
    %9 = vector.broadcast %c-1640531535_i32 : i32 to vector<1x2048xi32>
    %10 = arith.muli %7, %9 : vector<1x2048xi32>
    %c-2048144777_i32 = arith.constant -2048144777 : i32
    %11 = arith.muli %8, %c-2048144777_i32 : i32
    %c1_i32 = arith.constant 1 : i32
    %12 = arith.addi %11, %c1_i32 : i32
    %13 = vector.broadcast %12 : i32 to vector<1x2048xi32>
    %14 = arith.addi %10, %13 : vector<1x2048xi32>
    %c16_i32 = arith.constant 16 : i32
    %15 = vector.broadcast %c16_i32 : i32 to vector<1x2048xi32>
    %16 = arith.shrui %14, %15 : vector<1x2048xi32>
    %17 = arith.xori %14, %16 : vector<1x2048xi32>
    %c2146121005_i32 = arith.constant 2146121005 : i32
    %18 = vector.broadcast %c2146121005_i32 : i32 to vector<1x2048xi32>
    %19 = arith.muli %17, %18 : vector<1x2048xi32>
    %c15_i32 = arith.constant 15 : i32
    %20 = vector.broadcast %c15_i32 : i32 to vector<1x2048xi32>
    %21 = arith.shrui %19, %20 : vector<1x2048xi32>
    %22 = arith.xori %19, %21 : vector<1x2048xi32>
    %c-2073254261_i32 = arith.constant -2073254261 : i32
    %23 = vector.broadcast %c-2073254261_i32 : i32 to vector<1x2048xi32>
    %24 = arith.muli %22, %23 : vector<1x2048xi32>
    %c16_i32_1 = arith.constant 16 : i32
    %25 = vector.broadcast %c16_i32_1 : i32 to vector<1x2048xi32>
    %26 = arith.shrui %24, %25 : vector<1x2048xi32>
    %27 = arith.xori %24, %26 : vector<1x2048xi32>
    %c-1288490189_i32 = arith.constant -1288490189 : i32
    %28 = vector.broadcast %c-1288490189_i32 : i32 to vector<1x2048xi32>
    %29 = arith.cmpi ult, %27, %28 : vector<1x2048xi32>
    %c0_2 = arith.constant 0 : index
    %c0_3 = arith.constant 0 : index
    %30 = vector.load %arg2[%c0_2, %c0_3] : memref<1x2048xf32, #tpu.memory_space<vmem>>, vector<1x2048xf32>
    %cst = arith.constant 1.42857146 : f32
    %31 = vector.broadcast %cst : f32 to vector<1x2048xf32>
    %32 = arith.mulf %30, %31 : vector<1x2048xf32>
    %cst_4 = arith.constant 0.000000e+00 : f32
    %33 = vector.broadcast %cst_4 : f32 to vector<1x2048xf32>
    %34 = arith.select %29, %32, %33 : vector<1x2048xi1>, vector<1x2048xf32>
    %c0_5 = arith.constant 0 : index
    %c0_6 = arith.constant 0 : index
    %35 = vector.load %arg3[%c0_5, %c0_6] : memref<1x2048xf32, #tpu.memory_space<vmem>>, vector<1x2048xf32>
    tpu.vector_store %arg3[%c0_5, %c0_6], %34 {strides = array<i32>} : memref<1x2048xf32, #tpu.memory_space<vmem>>, vector<1x2048xf32>,
    return
  }
  func.func @transform_0(%arg0: i32, %arg1: memref<1xi32, #tpu.memory_space<smem>>) -> (i32, i32) {
    %c0_i32 = arith.constant 0 : i32
    %c0_i32_0 = arith.constant 0 : i32
    return %arg0, %c0_i32 : i32, i32
  }
  func.func @transform_1(%arg0: i32, %arg1: memref<1xi32, #tpu.memory_space<smem>>) -> (i32, i32) {
    %c0_i32 = arith.constant 0 : i32
    %c0_i32_0 = arith.constant 0 : i32
    return %arg0, %c0_i32 : i32, i32
  }
}

</mosaic_0001>

<llo_original>
// kernel: tpu_custom_call.1
$region0: #{tpu_custom_call.1}
  #allocation0 [shape = 'u32[]', space=smem, size = 0x4, offset = 0x4, fixed_abs, tag = 'smem constant byte address 0x4 - core index']
  #allocation1 [shape = 'u32[144,128]{1,0:T(1,128)}', space=vmem, size = 0x12000, scoped, tag = 'internal scratch']
  #allocation2 [shape = 's32[1]{0}', space=sflag, size = 0x4, scoped, tag = 'scoped memory for tpu_custom_call.1']
  #allocation3 [shape = 's32[1]{0:T(128)S(6)}', space=smem, size = 0x200, scoped, tag = 'prefetched SMEM operand 0']
  %s0 = inlined_call_operand.<no memory space> [shape: s32[1], index: 0, kind: input, shape index: {}]
  %s1 = inlined_call_operand.hbm [shape: f32[1,2048], index: 1, kind: input, shape index: {}]
  %s2 = inlined_call_operand.hbm [shape: f32[1,2048], index: 2, kind: output, shape index: {}]
  %s3 = sld [smem:[#allocation0]]
  $region18: #{tpu_custom_call.1} parent=0
    _
  %s5 = ssub.s32 1, %s3
  %s6 = scalar_select 0, %s5, %s3
  %7 = sst [smem:[#allocation3]] %s0
  $region1: #{tpu_custom_call.1} parent=0
    #allocation4 [shape = 'u8[8192]{0}', space=vmem, size = 0x2000, scoped, tag = 'input window, operand 1, single buffered']
    #allocation5 [shape = 's32[1]{0}', space=sflag, size = 0x4, scoped, tag = 'scoped memory for tpu_custom_call.1']
    #allocation6 [shape = 's32[1]{0}', space=sflag, size = 0x4, scoped, tag = 'scoped memory for tpu_custom_call.1']
    #allocation7 [shape = 'u8[8192]{0}', space=vmem, size = 0x2000, scoped, tag = 'output window, operand 0, single buffered']
    %8 = vsyncpa [#allocation5], 0
    %9 = vsyncpa [#allocation6], 0
    // Predicated region
    $region2: #{tpu_custom_call.1} parent=1 // pred_check
      _
    $region3: #{tpu_custom_call.1} parent=1 // pred_check_branch
      %11 = sbr.rel (0) target = $region5
    $region4: #{tpu_custom_call.1} parent=1 // pred_region
      %s13 = ssub.s32 256, 256
      %14 = vsyncadd [#allocation5], %s13
      %s16 = sshll.u32 [#allocation4], 4
      %s17 = int_to_ptr.vmem [resolvable:$true] %s16
      %19 = dma.hbm_to_vmem [thread:$0]  %s1, 256, %s17, [#allocation5]
    $region5: #{tpu_custom_call.1} parent=1 // pred_fallthru
      _
    // Predicated region
    $region6: #{tpu_custom_call.1} parent=1 // pred_check
      _
    $region7: #{tpu_custom_call.1} parent=1 // pred_check_branch
      %21 = sbr.rel (0) target = $region9
    $region8: #{tpu_custom_call.1} parent=1 // pred_region
      %22 = dma.done [#allocation5], 256
    $region9: #{tpu_custom_call.1} parent=1 // pred_fallthru
      _
    %v23 = vlaneseq
    %v24 = vshrl.u32 %v23, 7
    %v25 = vlaneseq
    %v26 = vand.u32 %v25, 127
    %v27 = vadd.s32 %v26, 128
    %v28 = vadd.s32 %v26, 256
    %v29 = vadd.s32 %v26, 384
    %v30 = vadd.s32 %v26, 512
    %v31 = vadd.s32 %v26, 640
    %v32 = vadd.s32 %v26, 768
    %v33 = vadd.s32 %v26, 896
    %v34 = vadd.s32 %v26, 1024
    %v35 = vadd.s32 %v26, 1152
    %v36 = vadd.s32 %v26, 1280
    %v37 = vadd.s32 %v26, 1408
    %v38 = vadd.s32 %v26, 1536
    %v39 = vadd.s32 %v26, 1664
    %v40 = vadd.s32 %v26, 1792
    %v41 = vadd.s32 %v26, 1920
    %s42 = smul.u32 0, 2048
    %v43 = vmul.u32 %v24, 2048
    %v44 = vstv %s42
    %v45 = vadd.s32 %v44, %v43
    %v46 = vadd.s32 %v45, %v26
    %v47 = vadd.s32 %v45, %v27
    %v48 = vadd.s32 %v45, %v28
    %v49 = vadd.s32 %v45, %v29
    %v50 = vadd.s32 %v45, %v30
    %v51 = vadd.s32 %v45, %v31
    %v52 = vadd.s32 %v45, %v32
    %v53 = vadd.s32 %v45, %v33
    %v54 = vadd.s32 %v45, %v34
    %v55 = vadd.s32 %v45, %v35
    %v56 = vadd.s32 %v45, %v36
    %v57 = vadd.s32 %v45, %v37
    %v58 = vadd.s32 %v45, %v38
    %v59 = vadd.s32 %v45, %v39
    %v60 = vadd.s32 %v45, %v40
    %v61 = vadd.s32 %v45, %v41
    %s62 = sld [smem:[#allocation3]]
    %v63 = vmul.u32 %v46, 2654435761
    %v64 = vmul.u32 %v47, 2654435761
    %v65 = vmul.u32 %v48, 2654435761
    %v66 = vmul.u32 %v49, 2654435761
    %v67 = vmul.u32 %v50, 2654435761
    %v68 = vmul.u32 %v51, 2654435761
    %v69 = vmul.u32 %v52, 2654435761
    %v70 = vmul.u32 %v53, 2654435761
    %v71 = vmul.u32 %v54, 2654435761
    %v72 = vmul.u32 %v55, 2654435761
    %v73 = vmul.u32 %v56, 2654435761
    %v74 = vmul.u32 %v57, 2654435761
    %v75 = vmul.u32 %v58, 2654435761
    %v76 = vmul.u32 %v59, 2654435761
    %v77 = vmul.u32 %v60, 2654435761
    %v78 = vmul.u32 %v61, 2654435761
    %s79 = smul.u32 %s62, 2246822519
    %s80 = sadd.s32 %s79, 1
    %v81 = vstv %s80
    %v82 = vadd.s32 %v63, %v81
    %v83 = vadd.s32 %v64, %v81
    %v84 = vadd.s32 %v65, %v81
    %v85 = vadd.s32 %v66, %v81
    %v86 = vadd.s32 %v67, %v81
    %v87 = vadd.s32 %v68, %v81
    %v88 = vadd.s32 %v69, %v81
    %v89 = vadd.s32 %v70, %v81
    %v90 = vadd.s32 %v71, %v81
    %v91 = vadd.s32 %v72, %v81
    %v92 = vadd.s32 %v73, %v81
    %v93 = vadd.s32 %v74, %v81
    %v94 = vadd.s32 %v75, %v81
    %v95 = vadd.s32 %v76, %v81
    %v96 = vadd.s32 %v77, %v81
    %v97 = vadd.s32 %v78, %v81
    %v98 = vshrl.u32 %v82, 16
    %v99 = vshrl.u32 %v83, 16
    %v100 = vshrl.u32 %v84, 16
    %v101 = vshrl.u32 %v85, 16
    %v102 = vshrl.u32 %v86, 16
    %v103 = vshrl.u32 %v87, 16
    %v104 = vshrl.u32 %v88, 16
    %v105 = vshrl.u32 %v89, 16
    %v106 = vshrl.u32 %v90, 16
    %v107 = vshrl.u32 %v91, 16
    %v108 = vshrl.u32 %v92, 16
    %v109 = vshrl.u32 %v93, 16
    %v110 = vshrl.u32 %v94, 16
    %v111 = vshrl.u32 %v95, 16
    %v112 = vshrl.u32 %v96, 16
    %v113 = vshrl.u32 %v97, 16
    %v114 = vxor.u32 %v82, %v98
    %v115 = vxor.u32 %v83, %v99
    %v116 = vxor.u32 %v84, %v100
    %v117 = vxor.u32 %v85, %v101
    %v118 = vxor.u32 %v86, %v102
    %v119 = vxor.u32 %v87, %v103
    %v120 = vxor.u32 %v88, %v104
    %v121 = vxor.u32 %v89, %v105
    %v122 = vxor.u32 %v90, %v106
    %v123 = vxor.u32 %v91, %v107
    %v124 = vxor.u32 %v92, %v108
    %v125 = vxor.u32 %v93, %v109
    %v126 = vxor.u32 %v94, %v110
    %v127 = vxor.u32 %v95, %v111
    %v128 = vxor.u32 %v96, %v112
    %v129 = vxor.u32 %v97, %v113
    %v130 = vmul.u32 %v114, 2146121005
    %v131 = vmul.u32 %v115, 2146121005
    %v132 = vmul.u32 %v116, 2146121005
    %v133 = vmul.u32 %v117, 2146121005
    %v134 = vmul.u32 %v118, 2146121005
    %v135 = vmul.u32 %v119, 2146121005
    %v136 = vmul.u32 %v120, 2146121005
    %v137 = vmul.u32 %v121, 2146121005
    %v138 = vmul.u32 %v122, 2146121005
    %v139 = vmul.u32 %v123, 2146121005
    %v140 = vmul.u32 %v124, 2146121005
    %v141 = vmul.u32 %v125, 2146121005
    %v142 = vmul.u32 %v126, 2146121005
    %v143 = vmul.u32 %v127, 2146121005
    %v144 = vmul.u32 %v128, 2146121005
    %v145 = vmul.u32 %v129, 2146121005
    %v146 = vshrl.u32 %v130, 15
    %v147 = vshrl.u32 %v131, 15
    %v148 = vshrl.u32 %v132, 15
    %v149 = vshrl.u32 %v133, 15
    %v150 = vshrl.u32 %v134, 15
    %v151 = vshrl.u32 %v135, 15
    %v152 = vshrl.u32 %v136, 15
    %v153 = vshrl.u32 %v137, 15
    %v154 = vshrl.u32 %v138, 15
    %v155 = vshrl.u32 %v139, 15
    %v156 = vshrl.u32 %v140, 15
    %v157 = vshrl.u32 %v141, 15
    %v158 = vshrl.u32 %v142, 15
    %v159 = vshrl.u32 %v143, 15
    %v160 = vshrl.u32 %v144, 15
    %v161 = vshrl.u32 %v145, 15
    %v162 = vxor.u32 %v130, %v146
    %v163 = vxor.u32 %v131, %v147
    %v164 = vxor.u32 %v132, %v148
    %v165 = vxor.u32 %v133, %v149
    %v166 = vxor.u32 %v134, %v150
    %v167 = vxor.u32 %v135, %v151
    %v168 = vxor.u32 %v136, %v152
    %v169 = vxor.u32 %v137, %v153
    %v170 = vxor.u32 %v138, %v154
    %v171 = vxor.u32 %v139, %v155
    %v172 = vxor.u32 %v140, %v156
    %v173 = vxor.u32 %v141, %v157
    %v174 = vxor.u32 %v142, %v158
    %v175 = vxor.u32 %v143, %v159
    %v176 = vxor.u32 %v144, %v160
    %v177 = vxor.u32 %v145, %v161
    %v178 = vmul.u32 %v162, 2221713035
    %v179 = vmul.u32 %v163, 2221713035
    %v180 = vmul.u32 %v164, 2221713035
    %v181 = vmul.u32 %v165, 2221713035
    %v182 = vmul.u32 %v166, 2221713035
    %v183 = vmul.u32 %v167, 2221713035
    %v184 = vmul.u32 %v168, 2221713035
    %v185 = vmul.u32 %v169, 2221713035
    %v186 = vmul.u32 %v170, 2221713035
    %v187 = vmul.u32 %v171, 2221713035
    %v188 = vmul.u32 %v172, 2221713035
    %v189 = vmul.u32 %v173, 2221713035
    %v190 = vmul.u32 %v174, 2221713035
    %v191 = vmul.u32 %v175, 2221713035
    %v192 = vmul.u32 %v176, 2221713035
    %v193 = vmul.u32 %v177, 2221713035
    %v194 = vshrl.u32 %v178, 16
    %v195 = vshrl.u32 %v179, 16
    %v196 = vshrl.u32 %v180, 16
    %v197 = vshrl.u32 %v181, 16
    %v198 = vshrl.u32 %v182, 16
    %v199 = vshrl.u32 %v183, 16
    %v200 = vshrl.u32 %v184, 16
    %v201 = vshrl.u32 %v185, 16
    %v202 = vshrl.u32 %v186, 16
    %v203 = vshrl.u32 %v187, 16
    %v204 = vshrl.u32 %v188, 16
    %v205 = vshrl.u32 %v189, 16
    %v206 = vshrl.u32 %v190, 16
    %v207 = vshrl.u32 %v191, 16
    %v208 = vshrl.u32 %v192, 16
    %v209 = vshrl.u32 %v193, 16
    %v210 = vxor.u32 %v178, %v194
    %v211 = vxor.u32 %v179, %v195
    %v212 = vxor.u32 %v180, %v196
    %v213 = vxor.u32 %v181, %v197
    %v214 = vxor.u32 %v182, %v198
    %v215 = vxor.u32 %v183, %v199
    %v216 = vxor.u32 %v184, %v200
    %v217 = vxor.u32 %v185, %v201
    %v218 = vxor.u32 %v186, %v202
    %v219 = vxor.u32 %v187, %v203
    %v220 = vxor.u32 %v188, %v204
    %v221 = vxor.u32 %v189, %v205
    %v222 = vxor.u32 %v190, %v206
    %v223 = vxor.u32 %v191, %v207
    %v224 = vxor.u32 %v192, %v208
    %v225 = vxor.u32 %v193, %v209
    %vm226 = vcmp.lt.u32.totalorder %v210, 3006477107
    %vm227 = vcmp.lt.u32.totalorder %v211, 3006477107
    %vm228 = vcmp.lt.u32.totalorder %v212, 3006477107
    %vm229 = vcmp.lt.u32.totalorder %v213, 3006477107
    %vm230 = vcmp.lt.u32.totalorder %v214, 3006477107
    %vm231 = vcmp.lt.u32.totalorder %v215, 3006477107
    %vm232 = vcmp.lt.u32.totalorder %v216, 3006477107
    %vm233 = vcmp.lt.u32.totalorder %v217, 3006477107
    %vm234 = vcmp.lt.u32.totalorder %v218, 3006477107
    %vm235 = vcmp.lt.u32.totalorder %v219, 3006477107
    %vm236 = vcmp.lt.u32.totalorder %v220, 3006477107
    %vm237 = vcmp.lt.u32.totalorder %v221, 3006477107
    %vm238 = vcmp.lt.u32.totalorder %v222, 3006477107
    %vm239 = vcmp.lt.u32.totalorder %v223, 3006477107
    %vm240 = vcmp.lt.u32.totalorder %v224, 3006477107
    %vm241 = vcmp.lt.u32.totalorder %v225, 3006477107
    %v242 = vld [vmem:[#allocation4] sm:$0xff]
    %v243 = vld [vmem:[#allocation4 + $0x8] sm:$0xff]
    %v244 = vmul.f32 %v242, 1.4285715
    %v245 = vmul.f32 %v243, 1.4285715
    %v248 = vlaneseq
    %v249 = vshrl.u32 %v248, 7
    %v250 = vsub.s32 0, %v249
    %v251 = vrot.slane %v244, %v250
    %v252 = vlaneseq
    %v253 = vshrl.u32 %v252, 7
    %v254 = vsub.s32 1, %v253
    %v255 = vrot.slane %v244, %v254
    %v256 = vlaneseq
    %v257 = vshrl.u32 %v256, 7
    %v258 = vsub.s32 2, %v257
    %v259 = vrot.slane %v244, %v258
    %v260 = vlaneseq
    %v261 = vshrl.u32 %v260, 7
    %v262 = vsub.s32 3, %v261
    %v263 = vrot.slane %v244, %v262
    %v264 = vlaneseq
    %v265 = vshrl.u32 %v264, 7
    %v266 = vsub.s32 4, %v265
    %v267 = vrot.slane %v244, %v266
    %v268 = vlaneseq
    %v269 = vshrl.u32 %v268, 7
    %v270 = vsub.s32 5, %v269
    %v271 = vrot.slane %v244, %v270
    %v272 = vlaneseq
    %v273 = vshrl.u32 %v272, 7
    %v274 = vsub.s32 6, %v273
    %v275 = vrot.slane %v244, %v274
    %v276 = vlaneseq
    %v277 = vshrl.u32 %v276, 7
    %v278 = vsub.s32 7, %v277
    %v279 = vrot.slane %v244, %v278
    %v280 = vlaneseq
    %v281 = vshrl.u32 %v280, 7
    %v282 = vsub.s32 0, %v281
    %v283 = vrot.slane %v245, %v282
    %v284 = vlaneseq
    %v285 = vshrl.u32 %v284, 7
    %v286 = vsub.s32 1, %v285
    %v287 = vrot.slane %v245, %v286
    %v288 = vlaneseq
    %v289 = vshrl.u32 %v288, 7
    %v290 = vsub.s32 2, %v289
    %v291 = vrot.slane %v245, %v290
    %v292 = vlaneseq
    %v293 = vshrl.u32 %v292, 7
    %v294 = vsub.s32 3, %v293
    %v295 = vrot.slane %v245, %v294
    %v296 = vlaneseq
    %v297 = vshrl.u32 %v296, 7
    %v298 = vsub.s32 4, %v297
    %v299 = vrot.slane %v245, %v298
    %v300 = vlaneseq
    %v301 = vshrl.u32 %v300, 7
    %v302 = vsub.s32 5, %v301
    %v303 = vrot.slane %v245, %v302
    %v304 = vlaneseq
    %v305 = vshrl.u32 %v304, 7
    %v306 = vsub.s32 6, %v305
    %v307 = vrot.slane %v245, %v306
    %v308 = vlaneseq
    %v309 = vshrl.u32 %v308, 7
    %v310 = vsub.s32 7, %v309
    %v311 = vrot.slane %v245, %v310
    %v328 = vsel %vm226, %v251, 0.0
    %v329 = vsel %vm227, %v255, 0.0
    %v330 = vsel %vm228, %v259, 0.0
    %v331 = vsel %vm229, %v263, 0.0
    %v332 = vsel %vm230, %v267, 0.0
    %v333 = vsel %vm231, %v271, 0.0
    %v334 = vsel %vm232, %v275, 0.0
    %v335 = vsel %vm233, %v279, 0.0
    %v336 = vsel %vm234, %v283, 0.0
    %v337 = vsel %vm235, %v287, 0.0
    %v338 = vsel %vm236, %v291, 0.0
    %v339 = vsel %vm237, %v295, 0.0
    %v340 = vsel %vm238, %v299, 0.0
    %v341 = vsel %vm239, %v303, 0.0
    %v342 = vsel %vm240, %v307, 0.0
    %v343 = vsel %vm241, %v311, 0.0
    %v360 = vcombine.low %v328, %v329
    %v361 = vcombine.low %v330, %v331
    %v362 = vcombine.low %v332, %v333
    %v363 = vcombine.low %v334, %v335
    %v365 = vunpack.c.l.s4 1966171168
    %v366 = vunpack.c.0.s8 %v365
    %v367 = vlaneseq
    %v368 = vshrl.u32 %v367, 7
    %v369 = vsub.s32 %v366, %v368
    %v370 = vrot.slane %v360, %v369
    %v372 = vunpack.c.l.s4 1966171168
    %v373 = vunpack.c.0.s8 %v372
    %v374 = vlaneseq
    %v375 = vshrl.u32 %v374, 7
    %v376 = vsub.s32 %v373, %v375
    %v377 = vrot.slane %v361, %v376
    %v379 = vunpack.c.l.s4 1966171168
    %v380 = vunpack.c.0.s8 %v379
    %v381 = vlaneseq
    %v382 = vshrl.u32 %v381, 7
    %v383 = vsub.s32 %v380, %v382
    %v384 = vrot.slane %v362, %v383
    %v386 = vunpack.c.l.s4 1966171168
    %v387 = vunpack.c.0.s8 %v386
    %v388 = vlaneseq
    %v389 = vshrl.u32 %v388, 7
    %v390 = vsub.s32 %v387, %v389
    %v391 = vrot.slane %v363, %v390
    %v392 = vcombine.low %v370, %v377
    %v393 = vcombine.low %v384, %v391
    %v395 = vunpack.c.l.s4 1966171168
    %v396 = vunpack.c.0.s8 %v395
    %v397 = vlaneseq
    %v398 = vshrl.u32 %v397, 7
    %v399 = vsub.s32 %v396, %v398
    %v400 = vrot.slane %v392, %v399
    %v402 = vunpack.c.l.s4 1966171168
    %v403 = vunpack.c.0.s8 %v402
    %v404 = vlaneseq
    %v405 = vshrl.u32 %v404, 7
    %v406 = vsub.s32 %v403, %v405
    %v407 = vrot.slane %v393, %v406
    %v408 = vcombine.low %v400, %v407
    %v409 = vcombine.low %v336, %v337
    %v410 = vcombine.low %v338, %v339
    %v411 = vcombine.low %v340, %v341
    %v412 = vcombine.low %v342, %v343
    %v414 = vunpack.c.l.s4 1966171168
    %v415 = vunpack.c.0.s8 %v414
    %v416 = vlaneseq
    %v417 = vshrl.u32 %v416, 7
    %v418 = vsub.s32 %v415, %v417
    %v419 = vrot.slane %v409, %v418
    %v421 = vunpack.c.l.s4 1966171168
    %v422 = vunpack.c.0.s8 %v421
    %v423 = vlaneseq
    %v424 = vshrl.u32 %v423, 7
    %v425 = vsub.s32 %v422, %v424
    %v426 = vrot.slane %v410, %v425
    %v428 = vunpack.c.l.s4 1966171168
    %v429 = vunpack.c.0.s8 %v428
    %v430 = vlaneseq
    %v431 = vshrl.u32 %v430, 7
    %v432 = vsub.s32 %v429, %v431
    %v433 = vrot.slane %v411, %v432
    %v435 = vunpack.c.l.s4 1966171168
    %v436 = vunpack.c.0.s8 %v435
    %v437 = vlaneseq
    %v438 = vshrl.u32 %v437, 7
    %v439 = vsub.s32 %v436, %v438
    %v440 = vrot.slane %v412, %v439
    %v441 = vcombine.low %v419, %v426
    %v442 = vcombine.low %v433, %v440
    %v444 = vunpack.c.l.s4 1966171168
    %v445 = vunpack.c.0.s8 %v444
    %v446 = vlaneseq
    %v447 = vshrl.u32 %v446, 7
    %v448 = vsub.s32 %v445, %v447
    %v449 = vrot.slane %v441, %v448
    %v451 = vunpack.c.l.s4 1966171168
    %v452 = vunpack.c.0.s8 %v451
    %v453 = vlaneseq
    %v454 = vshrl.u32 %v453, 7
    %v455 = vsub.s32 %v452, %v454
    %v456 = vrot.slane %v442, %v455
    %v457 = vcombine.low %v449, %v456
    %460 = vst [vmem:[#allocation7] sm:$0xff] %v408
    %461 = vst [vmem:[#allocation7 + $0x8] sm:$0xff] %v457
    // Predicated region
    $region10: #{tpu_custom_call.1} parent=1 // pred_check
      _
    $region11: #{tpu_custom_call.1} parent=1 // pred_check_branch
      %463 = sbr.rel (0) target = $region13
    $region12: #{tpu_custom_call.1} parent=1 // pred_region
      %s465 = ssub.s32 256, 256
      %466 = vsyncadd [#allocation6], %s465
      %s468 = sshll.u32 [#allocation7], 4
      %s469 = int_to_ptr.vmem [resolvable:$true] %s468
      %471 = dma.vmem_to_hbm [thread:$0]  %s469, 256, %s2, [#allocation6]
    $region13: #{tpu_custom_call.1} parent=1 // pred_fallthru
      _
    // Predicated region
    $region14: #{tpu_custom_call.1} parent=1 // pred_check
      _
    $region15: #{tpu_custom_call.1} parent=1 // pred_check_branch
      %473 = sbr.rel (0) target = $region17
    $region16: #{tpu_custom_call.1} parent=1 // pred_region
      %474 = dma.done [#allocation6], 256
    $region17: #{tpu_custom_call.1} parent=1 // pred_fallthru
      _
    %475 = vsyncpa [#allocation5], 1
    %476 = vsyncpa [#allocation6], 1

</llo_original>
